<compile_context>
chip_gen: v7x
topology: tpu7x:2x2x1
jax: 0.10.0
libtpu: 0.0.40
codegen_flags: <defaults>
</compile_context>

<pallas_src>
import functools

import jax
import jax.numpy as jnp
import numpy as np
from jax import lax
from jax.experimental import pallas as pl
from jax.experimental.pallas import tpu as pltpu

_LANE = 128


def _cdiv(a, b):
    return -(-a // b)


def _round_up(a, b):
    return _cdiv(a, b) * b


def _sublane_multiple(dtype):
    # Packed sublane tiling: f32 -> 8, bf16 -> 16, int8/fp8 -> 32.
    return max(8, 32 // jnp.dtype(dtype).itemsize)


def make_freq_bands(max_freq_log2, n_freqs, log_sampling=True):
    """Mirror of the PyTorch __init__ freq_bands computation."""
    if n_freqs <= 0:
        return []
    if log_sampling:
        bands = 2.0 ** np.linspace(0.0, max_freq_log2, n_freqs, dtype=np.float32)
    else:
        bands = np.linspace(2.0 ** 0.0, 2.0 ** max_freq_log2, n_freqs,
                            dtype=np.float32)
    return [float(b) for b in bands.tolist()]


def _freq_planes_kernel(x_ref, o_ref, *, freq_bands):
    # Direct sin/cos path.  The input tile is re-read per band so no full-tile
    # f32 temporary stays live across bands (small live ranges, no spills);
    # sin/cos run on the EUP, a free VLIW slot for this HBM-bound kernel.
    for k, f in enumerate(freq_bands):
        xf = x_ref[...].astype(jnp.float32) * f
        o_ref[2 * k, :, :] = jnp.sin(xf).astype(o_ref.dtype)
        o_ref[2 * k + 1, :, :] = jnp.cos(xf).astype(o_ref.dtype)


def _freq_planes_doubling_kernel(x_ref, o_ref, *, freq_bands, strip_rows,
                                 reseed_every):
    # Angle-doubling recurrence, strip-mined so (s, c) stay in a handful of
    # vregs across the band loop instead of spilling whole-tile arrays.
    # Re-seeded with exact sin/cos every `reseed_every` bands to bound error.
    n_strips = x_ref.shape[0] // strip_rows
    n_freqs = len(freq_bands)

    def strip_body(i, carry):
        r0 = pl.multiple_of(i * strip_rows, strip_rows)
        rows = pl.ds(r0, strip_rows)
        x = x_ref[rows, :].astype(jnp.float32)
        s = jnp.sin(x * freq_bands[0])
        c = jnp.cos(x * freq_bands[0])
        o_ref[0, rows, :] = s.astype(o_ref.dtype)
        o_ref[1, rows, :] = c.astype(o_ref.dtype)
        for k in range(1, n_freqs):
            if k % reseed_every == 0:
                xf = x * freq_bands[k]
                s, c = jnp.sin(xf), jnp.cos(xf)
            else:
                s, c = 2.0 * s * c, 1.0 - 2.0 * s * s
            o_ref[2 * k, rows, :] = s.astype(o_ref.dtype)
            o_ref[2 * k + 1, rows, :] = c.astype(o_ref.dtype)
        return carry

    lax.fori_loop(0, n_strips, strip_body, 0)


def freq_encoder(x, *, max_freq_log2, n_freqs, log_sampling=True,
                 include_input=True, out_dtype=None, interleave_output=True,
                 use_angle_doubling=False, max_tile_rows=1024,
                 vmem_target_bytes=16 * 1024 * 1024, doubling_strip_rows=32,
                 doubling_reseed_every=4):
    """Pallas implementation of FreqEncoder_torch.forward.

    x: (..., input_dim).  With interleave_output=True (default) returns
    (..., output_dim) matching the PyTorch concat order.  With
    interleave_output=False returns (n_comp, ..., input_dim) component planes
    (identity first if include_input), skipping the final reorder entirely.
    """
    # TODO(synk): custom periodic_fns other than (sin, cos) are not supported.
    if out_dtype is None:
        out_dtype = x.dtype
    out_dtype = jnp.dtype(out_dtype)
    input_dim = x.shape[-1]
    batch_shape = x.shape[:-1]
    total = int(np.prod(x.shape))
    assert total > 0, "empty input"

    freq_bands = make_freq_bands(max_freq_log2, n_freqs, log_sampling)
    n_planes = 2 * len(freq_bands)                      # kernel-produced planes
    n_comp = (1 if include_input else 0) + n_planes
    assert n_comp >= 1, "nothing to encode"
    output_dim = n_comp * input_dim
    n_pts = total // input_dim
    x2d = x.reshape(n_pts, input_dim)

    if n_planes == 0:
        out = x2d.astype(out_dtype)
        if not interleave_output:
            return out.reshape((1,) + batch_shape + (input_dim,))
        return out.reshape(batch_shape + (output_dim,))

    # Angle-doubling only for exact consecutive doublings (log-sampled bands).
    use_doubling = (
        use_angle_doubling and log_sampling and len(freq_bands) >= 2
        and all(freq_bands[k + 1] == 2.0 * freq_bands[k]
                for k in range(len(freq_bands) - 1)))

    # Row alignment: packed sublane multiple of BOTH dtypes; plus the doubling
    # strip size so strips tile the row tile exactly.
    align = max(_sublane_multiple(out_dtype), _sublane_multiple(x.dtype))
    if use_doubling:
        align = max(align, doubling_strip_rows)

    rows = _round_up(_cdiv(total, _LANE), align)

    in_item = jnp.dtype(x.dtype).itemsize
    out_item = out_dtype.itemsize
    bytes_per_row = _LANE * (in_item + n_planes * out_item)   # one buffer set
    # Double-buffered pipeline => 2x the per-set bytes must fit the budget.
    rows_fit = max(align,
                   (vmem_target_bytes // (2 * bytes_per_row)) // align * align)
    tile_cap = max(align, (max_tile_rows // align) * align)
    tile_rows = min(tile_cap, rows, rows_fit)
    # Keep >= 2 grid steps when possible so the "parallel" grid axis can shard
    # across both TensorCores on megacore parts (v7x).
    if rows > align and _cdiv(rows, tile_rows) < 2:
        tile_rows = _round_up(_cdiv(rows, 2), align)
    num_tiles = _cdiv(rows, tile_rows)
    padded_rows = num_tiles * tile_rows
    padded_total = padded_rows * _LANE

    x_flat = x.reshape(-1)
    if padded_total != total:
        x_flat = jnp.pad(x_flat, (0, padded_total - total))
    x_slab = x_flat.reshape(padded_rows, _LANE)

    if use_doubling:
        kernel = functools.partial(
            _freq_planes_doubling_kernel, freq_bands=freq_bands,
            strip_rows=doubling_strip_rows, reseed_every=doubling_reseed_every)
    else:
        kernel = functools.partial(_freq_planes_kernel, freq_bands=freq_bands)

    # Explicit VMEM limit: double-buffered in+out tiles plus headroom.
    footprint = 2 * tile_rows * bytes_per_row
    vmem_limit = int(max(32 * 1024 * 1024, footprint + 8 * 1024 * 1024))

    out_slab = pl.pallas_call(
        kernel,
        out_shape=jax.ShapeDtypeStruct((n_planes, padded_rows, _LANE), out_dtype),
        grid=(num_tiles,),
        in_specs=[pl.BlockSpec((tile_rows, _LANE), lambda i: (i, 0))],
        out_specs=pl.BlockSpec((n_planes, tile_rows, _LANE),
                               lambda i: (0, i, 0)),
        compiler_params=pltpu.CompilerParams(
            dimension_semantics=("parallel",),
            vmem_limit_bytes=vmem_limit),
    )(x_slab)

    planes = out_slab.reshape(n_planes, padded_total)[:, :total]
    planes = planes.reshape(n_planes, n_pts, input_dim)

    if not interleave_output:
        # Slab/planes layout contract with the consumer: no reorder at all.
        if include_input:
            planes = jnp.concatenate([x2d.astype(out_dtype)[None], planes],
                                     axis=0)
        return planes.reshape((n_comp,) + batch_shape + (input_dim,))

    # PyTorch-compatible interleaved layout.  The identity component comes
    # straight from x (never went through the kernel), so only the 2*n_freqs
    # sin/cos planes go through the reorder.
    pieces = []
    if include_input:
        pieces.append(x2d.astype(out_dtype)[:, None, :])
    pieces.append(jnp.transpose(planes, (1, 0, 2)))
    out = pieces[0] if len(pieces) == 1 else jnp.concatenate(pieces, axis=1)
    return out.reshape(batch_shape + (output_dim,))


def freq_encoder_ref(x, *, max_freq_log2, n_freqs, log_sampling=True,
                     include_input=True):
    """Pure-JAX reference matching the PyTorch forward semantics."""
    freq_bands = make_freq_bands(max_freq_log2, n_freqs, log_sampling)
    out = []
    if include_input:
        out.append(x)
    for f in freq_bands:
        out.append(jnp.sin(x * jnp.float32(f)))
        out.append(jnp.cos(x * jnp.float32(f)))
    return jnp.concatenate(out, axis=-1)


if __name__ == "__main__":
    # Module config (typical NeRF positional encoding, kept small):
    input_dim = 4
    n_freqs = 4
    max_freq_log2 = n_freqs - 1          # freq bands = 1, 2, 4, 8
    n_points = 64
    expected_dim = input_dim * (1 + 2 * n_freqs)

    key = jax.random.PRNGKey(0)
    k1, k2 = jax.random.split(key)
    x = jax.random.normal(k1, (n_points, input_dim), dtype=jnp.float32)
    ref = freq_encoder_ref(x, max_freq_log2=max_freq_log2, n_freqs=n_freqs,
                           log_sampling=True, include_input=True)

    # 1) Default path: log-sampled bands, direct sin/cos, f32 output.
    out = jax.block_until_ready(
        freq_encoder(x, max_freq_log2=max_freq_log2, n_freqs=n_freqs,
                     log_sampling=True, include_input=True))
    assert out.shape == (n_points, expected_dim), out.shape
    np.testing.assert_allclose(np.asarray(out), np.asarray(ref),
                               rtol=1e-5, atol=1e-5)

    # 2) Strip-mined angle-doubling path (optional, v7x-oriented).
    out_d = jax.block_until_ready(
        freq_encoder(x, max_freq_log2=max_freq_log2, n_freqs=n_freqs,
                     log_sampling=True, include_input=True,
                     use_angle_doubling=True))
    np.testing.assert_allclose(np.asarray(out_d), np.asarray(ref),
                               rtol=1e-4, atol=1e-4)

    # 3) Linear bands + ragged N (exercises padded tail, direct path).
    x2 = jax.random.normal(k2, (50, input_dim), dtype=jnp.float32)
    out2 = jax.block_until_ready(
        freq_encoder(x2, max_freq_log2=max_freq_log2, n_freqs=n_freqs,
                     log_sampling=False, include_input=True))
    ref2 = freq_encoder_ref(x2, max_freq_log2=max_freq_log2, n_freqs=n_freqs,
                            log_sampling=False, include_input=True)
    assert out2.shape == (50, expected_dim), out2.shape
    np.testing.assert_allclose(np.asarray(out2), np.asarray(ref2),
                               rtol=1e-5, atol=1e-5)

    # 4) bf16 writeback (halves the dominant HBM bytes; exercises the
    #    16-sublane output tiling path).
    out_bf16 = jax.block_until_ready(
        freq_encoder(x, max_freq_log2=max_freq_log2, n_freqs=n_freqs,
                     log_sampling=True, include_input=True,
                     out_dtype=jnp.bfloat16))
    assert out_bf16.dtype == jnp.bfloat16
    np.testing.assert_allclose(np.asarray(out_bf16, dtype=np.float32),
                               np.asarray(ref), rtol=2e-2, atol=2e-2)

    # 5) Planes layout (no wrapper reorder; consumer-side layout contract).
    planes = jax.block_until_ready(
        freq_encoder(x, max_freq_log2=max_freq_log2, n_freqs=n_freqs,
                     log_sampling=True, include_input=True,
                     interleave_output=False))
    assert planes.shape == (1 + 2 * n_freqs, n_points, input_dim), planes.shape
    re_interleaved = jnp.transpose(planes, (1, 0, 2)).reshape(n_points,
                                                              expected_dim)
    np.testing.assert_allclose(np.asarray(re_interleaved), np.asarray(ref),
                               rtol=1e-5, atol=1e-5)

    print("KERNEL_OK")
</pallas_src>

<mosaic_0001>
module attributes {stable_mosaic.version = 11 : i64} {
  func.func @_freq_planes_kernel(%arg0: i32, %arg1: memref<8x128xf32, #tpu.memory_space<vmem>>, %arg2: memref<8x8x128xf32, #tpu.memory_space<vmem>>) attributes {dimension_semantics = [#tpu.dimension_semantics<parallel>], iteration_bounds = array<i64: 1>, scalar_prefetch = 0 : i64, scratch_operands = 0 : i64, tpu.core_type = #tpu.core_type<tc>, window_params = [{transform_indices = @transform_0, window_bounds = array<i64: 8, 128>}, {transform_indices = @transform_1, window_bounds = array<i64: 8, 8, 128>}]} {
    %c0 = arith.constant 0 : index
    %c0_0 = arith.constant 0 : index
    %0 = vector.load %arg1[%c0, %c0_0] : memref<8x128xf32, #tpu.memory_space<vmem>>, vector<8x128xf32>
    %cst = arith.constant 1.000000e+00 : f32
    %1 = vector.broadcast %cst : f32 to vector<8x128xf32>
    %2 = arith.mulf %0, %1 : vector<8x128xf32>
    %3 = math.sin %2 : vector<8x128xf32>
    %c0_1 = arith.constant 0 : index
    %c0_2 = arith.constant 0 : index
    %c0_3 = arith.constant 0 : index
    %4 = vector.load %arg2[%c0_1, %c0_2, %c0_3] : memref<8x8x128xf32, #tpu.memory_space<vmem>>, vector<1x8x128xf32>
    %5 = vector.shape_cast %4 : vector<1x8x128xf32> to vector<8x128xf32>
    %6 = vector.shape_cast %3 : vector<8x128xf32> to vector<1x8x128xf32>
    tpu.vector_store %arg2[%c0_1, %c0_2, %c0_3], %6 {strides = array<i32>} : memref<8x8x128xf32, #tpu.memory_space<vmem>>, vector<1x8x128xf32>,
    %7 = math.cos %2 : vector<8x128xf32>
    %c1 = arith.constant 1 : index
    %c0_4 = arith.constant 0 : index
    %c0_5 = arith.constant 0 : index
    %8 = vector.load %arg2[%c1, %c0_4, %c0_5] : memref<8x8x128xf32, #tpu.memory_space<vmem>>, vector<1x8x128xf32>
    %9 = vector.shape_cast %8 : vector<1x8x128xf32> to vector<8x128xf32>
    %10 = vector.shape_cast %7 : vector<8x128xf32> to vector<1x8x128xf32>
    tpu.vector_store %arg2[%c1, %c0_4, %c0_5], %10 {strides = array<i32>} : memref<8x8x128xf32, #tpu.memory_space<vmem>>, vector<1x8x128xf32>,
    %c0_6 = arith.constant 0 : index
    %c0_7 = arith.constant 0 : index
    %11 = vector.load %arg1[%c0_6, %c0_7] : memref<8x128xf32, #tpu.memory_space<vmem>>, vector<8x128xf32>
    %cst_8 = arith.constant 2.000000e+00 : f32
    %12 = vector.broadcast %cst_8 : f32 to vector<8x128xf32>
    %13 = arith.mulf %11, %12 : vector<8x128xf32>
    %14 = math.sin %13 : vector<8x128xf32>
    %c2 = arith.constant 2 : index
    %c0_9 = arith.constant 0 : index
    %c0_10 = arith.constant 0 : index
    %15 = vector.load %arg2[%c2, %c0_9, %c0_10] : memref<8x8x128xf32, #tpu.memory_space<vmem>>, vector<1x8x128xf32>
    %16 = vector.shape_cast %15 : vector<1x8x128xf32> to vector<8x128xf32>
    %17 = vector.shape_cast %14 : vector<8x128xf32> to vector<1x8x128xf32>
    tpu.vector_store %arg2[%c2, %c0_9, %c0_10], %17 {strides = array<i32>} : memref<8x8x128xf32, #tpu.memory_space<vmem>>, vector<1x8x128xf32>,
    %18 = math.cos %13 : vector<8x128xf32>
    %c3 = arith.constant 3 : index
    %c0_11 = arith.constant 0 : index
    %c0_12 = arith.constant 0 : index
    %19 = vector.load %arg2[%c3, %c0_11, %c0_12] : memref<8x8x128xf32, #tpu.memory_space<vmem>>, vector<1x8x128xf32>
    %20 = vector.shape_cast %19 : vector<1x8x128xf32> to vector<8x128xf32>
    %21 = vector.shape_cast %18 : vector<8x128xf32> to vector<1x8x128xf32>
    tpu.vector_store %arg2[%c3, %c0_11, %c0_12], %21 {strides = array<i32>} : memref<8x8x128xf32, #tpu.memory_space<vmem>>, vector<1x8x128xf32>,
    %c0_13 = arith.constant 0 : index
    %c0_14 = arith.constant 0 : index
    %22 = vector.load %arg1[%c0_13, %c0_14] : memref<8x128xf32, #tpu.memory_space<vmem>>, vector<8x128xf32>
    %cst_15 = arith.constant 4.000000e+00 : f32
    %23 = vector.broadcast %cst_15 : f32 to vector<8x128xf32>
    %24 = arith.mulf %22, %23 : vector<8x128xf32>
    %25 = math.sin %24 : vector<8x128xf32>
    %c4 = arith.constant 4 : index
    %c0_16 = arith.constant 0 : index
    %c0_17 = arith.constant 0 : index
    %26 = vector.load %arg2[%c4, %c0_16, %c0_17] : memref<8x8x128xf32, #tpu.memory_space<vmem>>, vector<1x8x128xf32>
    %27 = vector.shape_cast %26 : vector<1x8x128xf32> to vector<8x128xf32>
    %28 = vector.shape_cast %25 : vector<8x128xf32> to vector<1x8x128xf32>
    tpu.vector_store %arg2[%c4, %c0_16, %c0_17], %28 {strides = array<i32>} : memref<8x8x128xf32, #tpu.memory_space<vmem>>, vector<1x8x128xf32>,
    %29 = math.cos %24 : vector<8x128xf32>
    %c5 = arith.constant 5 : index
    %c0_18 = arith.constant 0 : index
    %c0_19 = arith.constant 0 : index
    %30 = vector.load %arg2[%c5, %c0_18, %c0_19] : memref<8x8x128xf32, #tpu.memory_space<vmem>>, vector<1x8x128xf32>
    %31 = vector.shape_cast %30 : vector<1x8x128xf32> to vector<8x128xf32>
    %32 = vector.shape_cast %29 : vector<8x128xf32> to vector<1x8x128xf32>
    tpu.vector_store %arg2[%c5, %c0_18, %c0_19], %32 {strides = array<i32>} : memref<8x8x128xf32, #tpu.memory_space<vmem>>, vector<1x8x128xf32>,
    %c0_20 = arith.constant 0 : index
    %c0_21 = arith.constant 0 : index
    %33 = vector.load %arg1[%c0_20, %c0_21] : memref<8x128xf32, #tpu.memory_space<vmem>>, vector<8x128xf32>
    %cst_22 = arith.constant 8.000000e+00 : f32
    %34 = vector.broadcast %cst_22 : f32 to vector<8x128xf32>
    %35 = arith.mulf %33, %34 : vector<8x128xf32>
    %36 = math.sin %35 : vector<8x128xf32>
    %c6 = arith.constant 6 : index
    %c0_23 = arith.constant 0 : index
    %c0_24 = arith.constant 0 : index
    %37 = vector.load %arg2[%c6, %c0_23, %c0_24] : memref<8x8x128xf32, #tpu.memory_space<vmem>>, vector<1x8x128xf32>
    %38 = vector.shape_cast %37 : vector<1x8x128xf32> to vector<8x128xf32>
    %39 = vector.shape_cast %36 : vector<8x128xf32> to vector<1x8x128xf32>
    tpu.vector_store %arg2[%c6, %c0_23, %c0_24], %39 {strides = array<i32>} : memref<8x8x128xf32, #tpu.memory_space<vmem>>, vector<1x8x128xf32>,
    %40 = math.cos %35 : vector<8x128xf32>
    %c7 = arith.constant 7 : index
    %c0_25 = arith.constant 0 : index
    %c0_26 = arith.constant 0 : index
    %41 = vector.load %arg2[%c7, %c0_25, %c0_26] : memref<8x8x128xf32, #tpu.memory_space<vmem>>, vector<1x8x128xf32>
    %42 = vector.shape_cast %41 : vector<1x8x128xf32> to vector<8x128xf32>
    %43 = vector.shape_cast %40 : vector<8x128xf32> to vector<1x8x128xf32>
    tpu.vector_store %arg2[%c7, %c0_25, %c0_26], %43 {strides = array<i32>} : memref<8x8x128xf32, #tpu.memory_space<vmem>>, vector<1x8x128xf32>,
    return
  }
  func.func @transform_0(%arg0: i32) -> (i32, i32) {
    %c0_i32 = arith.constant 0 : i32
    %c0_i32_0 = arith.constant 0 : i32
    return %arg0, %c0_i32 : i32, i32
  }
  func.func @transform_1(%arg0: i32) -> (i32, i32, i32) {
    %c0_i32 = arith.constant 0 : i32
    %c0_i32_0 = arith.constant 0 : i32
    %c0_i32_1 = arith.constant 0 : i32
    return %c0_i32, %arg0, %c0_i32_0 : i32, i32, i32
  }
}

</mosaic_0001>

<llo_original>
// kernel: tpu_custom_call.1
$region0: #{tpu_custom_call.1}
  #allocation0 [shape = 'u32[]', space=smem, size = 0x4, offset = 0x4, fixed_abs, tag = 'smem constant byte address 0x4 - core index']
  #allocation1 [shape = 'u32[144,128]{1,0:T(1,128)}', space=vmem, size = 0x12000, scoped, tag = 'internal scratch']
  %s0 = inlined_call_operand.hbm [shape: f32[8,128], index: 0, kind: input, shape index: {}]
  %s1 = inlined_call_operand.hbm [shape: f32[8,8,128], index: 1, kind: output, shape index: {}]
  %s2 = sld [smem:[#allocation0]]
  $region18: #{tpu_custom_call.1} parent=0
    _
  %s4 = ssub.s32 1, %s2
  %s5 = scalar_select 0, %s4, %s2
  $region1: #{tpu_custom_call.1} parent=0
    #allocation2 [shape = 'u8[4096]{0}', space=vmem, size = 0x1000, scoped, tag = 'input window, operand 0, single buffered']
    #allocation3 [shape = 's32[1]{0}', space=sflag, size = 0x4, scoped, tag = 'scoped memory for tpu_custom_call.1']
    #allocation4 [shape = 's32[1]{0}', space=sflag, size = 0x4, scoped, tag = 'scoped memory for tpu_custom_call.1']
    #allocation5 [shape = 'u8[32768]{0}', space=vmem, size = 0x8000, scoped, tag = 'output window, operand 0, single buffered']
    %6 = vsyncpa [#allocation3], 0
    %7 = vsyncpa [#allocation4], 0
    // Predicated region
    $region2: #{tpu_custom_call.1} parent=1 // pred_check
      _
    $region3: #{tpu_custom_call.1} parent=1 // pred_check_branch
      %9 = sbr.rel (0) target = $region5
    $region4: #{tpu_custom_call.1} parent=1 // pred_region
      %s11 = ssub.s32 128, 128
      %12 = vsyncadd [#allocation3], %s11
      %s14 = sshll.u32 [#allocation2], 4
      %s15 = int_to_ptr.vmem [resolvable:$true] %s14
      %17 = dma.hbm_to_vmem [thread:$0]  %s0, 128, %s15, [#allocation3]
    $region5: #{tpu_custom_call.1} parent=1 // pred_fallthru
      _
    // Predicated region
    $region6: #{tpu_custom_call.1} parent=1 // pred_check
      _
    $region7: #{tpu_custom_call.1} parent=1 // pred_check_branch
      %19 = sbr.rel (0) target = $region9
    $region8: #{tpu_custom_call.1} parent=1 // pred_region
      %20 = dma.done [#allocation3], 128
    $region9: #{tpu_custom_call.1} parent=1 // pred_fallthru
      _
    %v21 = vld [vmem:[#allocation2] sm:$0xff]
    %v22 = vand.u32 2147483647, %v21
    %vm23 = vcmp.le.f32.partialorder %v22, 0.7853982
    %vm24 = vcmp.lt.s32.totalorder %v21, 0
    %v25 = vand.u32 %v21, 2139095040
    %v26 = vshrl.u32 %v25, 23
    %v27 = vsub.s32 %v26, 127
    %v28 = vand.u32 2147483647, %v21
    %v29 = vand.u32 %v28, 8388607
    %v30 = vor.u32 %v29, 8388608
    %v31 = vsub.s32 0, %v30
    %v32 = vadd.s32 %v27, 1
    %vm33 = vcmp.gt.s32.totalorder %v32, 0
    %v34 = vsel %vm33, %v32, 0
    %v35 = vshrl.u32 %v34, 5
    %v36 = vand.u32 %v34, 31
    %v37 = vsub.s32 32, %v36
    %v38 = vshrl.u32 683565275, %v37
    %v39 = vshll.u32 683565275, %v36
    %v40 = vshrl.u32 2475754826, %v37
    %v41 = vor.u32 %v39, %v40
    %v42 = vshll.u32 2475754826, %v36
    %v43 = vshrl.u32 2131351028, %v37
    %v44 = vor.u32 %v42, %v43
    %v45 = vshll.u32 2131351028, %v36
    %v46 = vshrl.u32 2102212464, %v37
    %v47 = vor.u32 %v45, %v46
    %v48 = vshll.u32 2102212464, %v36
    %v49 = vshrl.u32 920167782, %v37
    %v50 = vor.u32 %v48, %v49
    %v51 = vshll.u32 920167782, %v36
    %v52 = vshrl.u32 1326507024, %v37
    %v53 = vor.u32 %v51, %v52
    %vm54 = vcmp.lt.s32.totalorder %v35, 1
    %vm55 = vcmp.lt.s32.totalorder %v35, 2
    %vm56 = vcmp.lt.s32.totalorder %v35, 3
    %vm57 = vcmp.lt.s32.totalorder %v35, 4
    %v58 = vsel %vm54, %v38, %v41
    %v59 = vsel %vm57, %v47, 2102212464
    %v60 = vsel %vm56, %v44, %v59
    %v61 = vsel %vm55, %v58, %v60
    %v62 = vsel %vm54, %v41, %v44
    %v63 = vsel %vm57, %v50, 920167782
    %v64 = vsel %vm56, %v47, %v63
    %v65 = vsel %vm55, %v62, %v64
    %v66 = vsel %vm54, %v44, %v47
    %v67 = vsel %vm57, %v53, 1326507024
    %v68 = vsel %vm56, %v50, %v67
    %v69 = vsel %vm55, %v66, %v68
    %v70 = vshll.u32 %v30, 8
    %v71 = vmul.u32.u64.compose %v70, %v69
    %v72 = vextract.low.u32 %v71
    %v73 = vextract.high.u32 %v71
    %v74 = vmul.u32.u64.compose %v70, %v65
    %v75 = vextract.low.u32 %v74
    %v76 = vextract.high.u32 %v74
    %v77 = vmul.u32 %v70, %v61
    %v78 = vadd.s32 %v73, %v75
    %vm79 = vc.u32 %v73, %v75
    %v80 = vadd.s32 %v76, 1
    %v81 = vsel %vm79, %v80, %v76
    %v82 = vadd.s32 %v77, %v81
    %v83 = vadd.s32 %v82, 536870912
    %v84 = vshrl.u32 %v83, 30
    %v85 = vshll.u32 %v84, 30
    %v86 = vsub.s32 %v82, %v85
    %vm87 = vcmp.lt.s32.totalorder %v86, 0
    %v88 = vsub.s32 0, %v86
    %v89 = vsel %vm87, %v88, %v86
    %v90 = vclz %v89
    %v91 = vsub.s32 %v90, 2
    %vm92 = vcmp.gt.s32.totalorder 0, %v91
    %v93 = vsel %vm92, 0, %v91
    %v94 = vsub.s32 32, %v93
    %v95 = vshll.u32 %v86, %v93
    %v96 = vshrl.u32 %v78, %v94
    %v97 = vor.u32 %v95, %v96
    %v98 = vsub.s32 4294967266, %v93
    %v99 = vadd.s32 %v98, 127
    %v100 = vshll.u32 %v99, 23
    %v101 = vor.u32 4788187, %v100
    %v102 = vand.u32 2147483647, %v101
    %v104 = vcvt.s32.f32 %v97
    %v105 = vmul.f32 %v104, %v102
    %v106 = vxor.u32 %v105, 2147483648
    %v107 = vsel %vm24, %v106, %v105
    %v108 = vsub.s32 4, %v84
    %v109 = vsel %vm24, %v108, %v84
    %v110 = vsel %vm23, %v21, %v107
    %v111 = vsel %vm23, 0, %v109
    %v112 = vcosq.f32.pop %v110
    %v113 = vsinq.f32.pop %v110
    %vm114 = vweird.f32 %v21
    %v115 = vadd.s32 %v111, 3
    %v116 = vand.u32 %v115, 3
    %vm117 = vcmp.lt.s32.totalorder %v116, 2
    %vm118 = vcmp.eq.s32.totalorder %v116, 0
    %v119 = vxor.u32 %v113, 2147483648
    %v120 = vsel %vm118, %v112, %v119
    %vm121 = vcmp.eq.s32.totalorder %v116, 2
    %v122 = vxor.u32 %v112, 2147483648
    %v123 = vsel %vm121, %v122, %v113
    %v124 = vsel %vm117, %v120, %v123
    %v125 = vsel %vm114, nan, %v124
    %126 = vst [vmem:[#allocation5] sm:$0xff] %v125
    %v127 = vand.u32 2147483647, %v21
    %vm128 = vcmp.le.f32.partialorder %v127, 0.7853982
    %vm129 = vcmp.lt.s32.totalorder %v21, 0
    %v130 = vand.u32 %v21, 2139095040
    %v131 = vshrl.u32 %v130, 23
    %v132 = vsub.s32 %v131, 127
    %v133 = vand.u32 2147483647, %v21
    %v134 = vand.u32 %v133, 8388607
    %v135 = vor.u32 %v134, 8388608
    %v136 = vsub.s32 0, %v135
    %v137 = vadd.s32 %v132, 1
    %vm138 = vcmp.gt.s32.totalorder %v137, 0
    %v139 = vsel %vm138, %v137, 0
    %v140 = vshrl.u32 %v139, 5
    %v141 = vand.u32 %v139, 31
    %v142 = vsub.s32 32, %v141
    %v143 = vshrl.u32 683565275, %v142
    %v144 = vshll.u32 683565275, %v141
    %v145 = vshrl.u32 2475754826, %v142
    %v146 = vor.u32 %v144, %v145
    %v147 = vshll.u32 2475754826, %v141
    %v148 = vshrl.u32 2131351028, %v142
    %v149 = vor.u32 %v147, %v148
    %v150 = vshll.u32 2131351028, %v141
    %v151 = vshrl.u32 2102212464, %v142
    %v152 = vor.u32 %v150, %v151
    %v153 = vshll.u32 2102212464, %v141
    %v154 = vshrl.u32 920167782, %v142
    %v155 = vor.u32 %v153, %v154
    %v156 = vshll.u32 920167782, %v141
    %v157 = vshrl.u32 1326507024, %v142
    %v158 = vor.u32 %v156, %v157
    %vm159 = vcmp.lt.s32.totalorder %v140, 1
    %vm160 = vcmp.lt.s32.totalorder %v140, 2
    %vm161 = vcmp.lt.s32.totalorder %v140, 3
    %vm162 = vcmp.lt.s32.totalorder %v140, 4
    %v163 = vsel %vm159, %v143, %v146
    %v164 = vsel %vm162, %v152, 2102212464
    %v165 = vsel %vm161, %v149, %v164
    %v166 = vsel %vm160, %v163, %v165
    %v167 = vsel %vm159, %v146, %v149
    %v168 = vsel %vm162, %v155, 920167782
    %v169 = vsel %vm161, %v152, %v168
    %v170 = vsel %vm160, %v167, %v169
    %v171 = vsel %vm159, %v149, %v152
    %v172 = vsel %vm162, %v158, 1326507024
    %v173 = vsel %vm161, %v155, %v172
    %v174 = vsel %vm160, %v171, %v173
    %v175 = vshll.u32 %v135, 8
    %v176 = vmul.u32.u64.compose %v175, %v174
    %v177 = vextract.low.u32 %v176
    %v178 = vextract.high.u32 %v176
    %v179 = vmul.u32.u64.compose %v175, %v170
    %v180 = vextract.low.u32 %v179
    %v181 = vextract.high.u32 %v179
    %v182 = vmul.u32 %v175, %v166
    %v183 = vadd.s32 %v178, %v180
    %vm184 = vc.u32 %v178, %v180
    %v185 = vadd.s32 %v181, 1
    %v186 = vsel %vm184, %v185, %v181
    %v187 = vadd.s32 %v182, %v186
    %v188 = vadd.s32 %v187, 536870912
    %v189 = vshrl.u32 %v188, 30
    %v190 = vshll.u32 %v189, 30
    %v191 = vsub.s32 %v187, %v190
    %vm192 = vcmp.lt.s32.totalorder %v191, 0
    %v193 = vsub.s32 0, %v191
    %v194 = vsel %vm192, %v193, %v191
    %v195 = vclz %v194
    %v196 = vsub.s32 %v195, 2
    %vm197 = vcmp.gt.s32.totalorder 0, %v196
    %v198 = vsel %vm197, 0, %v196
    %v199 = vsub.s32 32, %v198
    %v200 = vshll.u32 %v191, %v198
    %v201 = vshrl.u32 %v183, %v199
    %v202 = vor.u32 %v200, %v201
    %v203 = vsub.s32 4294967266, %v198
    %v204 = vadd.s32 %v203, 127
    %v205 = vshll.u32 %v204, 23
    %v206 = vor.u32 4788187, %v205
    %v207 = vand.u32 2147483647, %v206
    %v209 = vcvt.s32.f32 %v202
    %v210 = vmul.f32 %v209, %v207
    %v211 = vxor.u32 %v210, 2147483648
    %v212 = vsel %vm129, %v211, %v210
    %v213 = vsub.s32 4, %v189
    %v214 = vsel %vm129, %v213, %v189
    %v215 = vsel %vm128, %v21, %v212
    %v216 = vsel %vm128, 0, %v214
    %v217 = vcosq.f32.pop %v215
    %v218 = vsinq.f32.pop %v215
    %vm219 = vweird.f32 %v21
    %v220 = vand.u32 %v216, 3
    %vm221 = vcmp.lt.s32.totalorder %v220, 2
    %vm222 = vcmp.eq.s32.totalorder %v220, 0
    %v223 = vxor.u32 %v218, 2147483648
    %v224 = vsel %vm222, %v217, %v223
    %vm225 = vcmp.eq.s32.totalorder %v220, 2
    %v226 = vxor.u32 %v217, 2147483648
    %v227 = vsel %vm225, %v226, %v218
    %v228 = vsel %vm221, %v224, %v227
    %v229 = vsel %vm219, nan, %v228
    %s230 = scalar_lea.vmem [#allocation5], 8
    %231 = vst [vmem:[%s230] sm:$0xff] %v229
    %v232 = vld [vmem:[#allocation2] sm:$0xff]
    %v233 = vmul.f32 %v232, 2.0
    %v234 = vand.u32 2147483647, %v233
    %vm235 = vcmp.le.f32.partialorder %v234, 0.7853982
    %vm236 = vcmp.lt.s32.totalorder %v233, 0
    %v237 = vand.u32 %v233, 2139095040
    %v238 = vshrl.u32 %v237, 23
    %v239 = vsub.s32 %v238, 127
    %v240 = vand.u32 2147483647, %v233
    %v241 = vand.u32 %v240, 8388607
    %v242 = vor.u32 %v241, 8388608
    %v243 = vsub.s32 0, %v242
    %v244 = vadd.s32 %v239, 1
    %vm245 = vcmp.gt.s32.totalorder %v244, 0
    %v246 = vsel %vm245, %v244, 0
    %v247 = vshrl.u32 %v246, 5
    %v248 = vand.u32 %v246, 31
    %v249 = vsub.s32 32, %v248
    %v250 = vshrl.u32 683565275, %v249
    %v251 = vshll.u32 683565275, %v248
    %v252 = vshrl.u32 2475754826, %v249
    %v253 = vor.u32 %v251, %v252
    %v254 = vshll.u32 2475754826, %v248
    %v255 = vshrl.u32 2131351028, %v249
    %v256 = vor.u32 %v254, %v255
    %v257 = vshll.u32 2131351028, %v248
    %v258 = vshrl.u32 2102212464, %v249
    %v259 = vor.u32 %v257, %v258
    %v260 = vshll.u32 2102212464, %v248
    %v261 = vshrl.u32 920167782, %v249
    %v262 = vor.u32 %v260, %v261
    %v263 = vshll.u32 920167782, %v248
    %v264 = vshrl.u32 1326507024, %v249
    %v265 = vor.u32 %v263, %v264
    %vm266 = vcmp.lt.s32.totalorder %v247, 1
    %vm267 = vcmp.lt.s32.totalorder %v247, 2
    %vm268 = vcmp.lt.s32.totalorder %v247, 3
    %vm269 = vcmp.lt.s32.totalorder %v247, 4
    %v270 = vsel %vm266, %v250, %v253
    %v271 = vsel %vm269, %v259, 2102212464
    %v272 = vsel %vm268, %v256, %v271
    %v273 = vsel %vm267, %v270, %v272
    %v274 = vsel %vm266, %v253, %v256
    %v275 = vsel %vm269, %v262, 920167782
    %v276 = vsel %vm268, %v259, %v275
    %v277 = vsel %vm267, %v274, %v276
    %v278 = vsel %vm266, %v256, %v259
    %v279 = vsel %vm269, %v265, 1326507024
    %v280 = vsel %vm268, %v262, %v279
    %v281 = vsel %vm267, %v278, %v280
    %v282 = vshll.u32 %v242, 8
    %v283 = vmul.u32.u64.compose %v282, %v281
    %v284 = vextract.low.u32 %v283
    %v285 = vextract.high.u32 %v283
    %v286 = vmul.u32.u64.compose %v282, %v277
    %v287 = vextract.low.u32 %v286
    %v288 = vextract.high.u32 %v286
    %v289 = vmul.u32 %v282, %v273
    %v290 = vadd.s32 %v285, %v287
    %vm291 = vc.u32 %v285, %v287
    %v292 = vadd.s32 %v288, 1
    %v293 = vsel %vm291, %v292, %v288
    %v294 = vadd.s32 %v289, %v293
    %v295 = vadd.s32 %v294, 536870912
    %v296 = vshrl.u32 %v295, 30
    %v297 = vshll.u32 %v296, 30
    %v298 = vsub.s32 %v294, %v297
    %vm299 = vcmp.lt.s32.totalorder %v298, 0
    %v300 = vsub.s32 0, %v298
    %v301 = vsel %vm299, %v300, %v298
    %v302 = vclz %v301
    %v303 = vsub.s32 %v302, 2
    %vm304 = vcmp.gt.s32.totalorder 0, %v303
    %v305 = vsel %vm304, 0, %v303
    %v306 = vsub.s32 32, %v305
    %v307 = vshll.u32 %v298, %v305
    %v308 = vshrl.u32 %v290, %v306
    %v309 = vor.u32 %v307, %v308
    %v310 = vsub.s32 4294967266, %v305
    %v311 = vadd.s32 %v310, 127
    %v312 = vshll.u32 %v311, 23
    %v313 = vor.u32 4788187, %v312
    %v314 = vand.u32 2147483647, %v313
    %v316 = vcvt.s32.f32 %v309
    %v317 = vmul.f32 %v316, %v314
    %v318 = vxor.u32 %v317, 2147483648
    %v319 = vsel %vm236, %v318, %v317
    %v320 = vsub.s32 4, %v296
    %v321 = vsel %vm236, %v320, %v296
    %v322 = vsel %vm235, %v233, %v319
    %v323 = vsel %vm235, 0, %v321
    %v324 = vcosq.f32.pop %v322
    %v325 = vsinq.f32.pop %v322
    %vm326 = vweird.f32 %v233
    %v327 = vadd.s32 %v323, 3
    %v328 = vand.u32 %v327, 3
    %vm329 = vcmp.lt.s32.totalorder %v328, 2
    %vm330 = vcmp.eq.s32.totalorder %v328, 0
    %v331 = vxor.u32 %v325, 2147483648
    %v332 = vsel %vm330, %v324, %v331
    %vm333 = vcmp.eq.s32.totalorder %v328, 2
    %v334 = vxor.u32 %v324, 2147483648
    %v335 = vsel %vm333, %v334, %v325
    %v336 = vsel %vm329, %v332, %v335
    %v337 = vsel %vm326, nan, %v336
    %s338 = scalar_lea.vmem [#allocation5], 16
    %339 = vst [vmem:[%s338] sm:$0xff] %v337
    %v340 = vand.u32 2147483647, %v233
    %vm341 = vcmp.le.f32.partialorder %v340, 0.7853982
    %vm342 = vcmp.lt.s32.totalorder %v233, 0
    %v343 = vand.u32 %v233, 2139095040
    %v344 = vshrl.u32 %v343, 23
    %v345 = vsub.s32 %v344, 127
    %v346 = vand.u32 2147483647, %v233
    %v347 = vand.u32 %v346, 8388607
    %v348 = vor.u32 %v347, 8388608
    %v349 = vsub.s32 0, %v348
    %v350 = vadd.s32 %v345, 1
    %vm351 = vcmp.gt.s32.totalorder %v350, 0
    %v352 = vsel %vm351, %v350, 0
    %v353 = vshrl.u32 %v352, 5
    %v354 = vand.u32 %v352, 31
    %v355 = vsub.s32 32, %v354
    %v356 = vshrl.u32 683565275, %v355
    %v357 = vshll.u32 683565275, %v354
    %v358 = vshrl.u32 2475754826, %v355
    %v359 = vor.u32 %v357, %v358
    %v360 = vshll.u32 2475754826, %v354
    %v361 = vshrl.u32 2131351028, %v355
    %v362 = vor.u32 %v360, %v361
    %v363 = vshll.u32 2131351028, %v354
    %v364 = vshrl.u32 2102212464, %v355
    %v365 = vor.u32 %v363, %v364
    %v366 = vshll.u32 2102212464, %v354
    %v367 = vshrl.u32 920167782, %v355
    %v368 = vor.u32 %v366, %v367
    %v369 = vshll.u32 920167782, %v354
    %v370 = vshrl.u32 1326507024, %v355
    %v371 = vor.u32 %v369, %v370
    %vm372 = vcmp.lt.s32.totalorder %v353, 1
    %vm373 = vcmp.lt.s32.totalorder %v353, 2
    %vm374 = vcmp.lt.s32.totalorder %v353, 3
    %vm375 = vcmp.lt.s32.totalorder %v353, 4
    %v376 = vsel %vm372, %v356, %v359
    %v377 = vsel %vm375, %v365, 2102212464
    %v378 = vsel %vm374, %v362, %v377
    %v379 = vsel %vm373, %v376, %v378
    %v380 = vsel %vm372, %v359, %v362
    %v381 = vsel %vm375, %v368, 920167782
    %v382 = vsel %vm374, %v365, %v381
    %v383 = vsel %vm373, %v380, %v382
    %v384 = vsel %vm372, %v362, %v365
    %v385 = vsel %vm375, %v371, 1326507024
    %v386 = vsel %vm374, %v368, %v385
    %v387 = vsel %vm373, %v384, %v386
    %v388 = vshll.u32 %v348, 8
    %v389 = vmul.u32.u64.compose %v388, %v387
    %v390 = vextract.low.u32 %v389
    %v391 = vextract.high.u32 %v389
    %v392 = vmul.u32.u64.compose %v388, %v383
    %v393 = vextract.low.u32 %v392
    %v394 = vextract.high.u32 %v392
    %v395 = vmul.u32 %v388, %v379
    %v396 = vadd.s32 %v391, %v393
    %vm397 = vc.u32 %v391, %v393
    %v398 = vadd.s32 %v394, 1
    %v399 = vsel %vm397, %v398, %v394
    %v400 = vadd.s32 %v395, %v399
    %v401 = vadd.s32 %v400, 536870912
    %v402 = vshrl.u32 %v401, 30
    %v403 = vshll.u32 %v402, 30
    %v404 = vsub.s32 %v400, %v403
    %vm405 = vcmp.lt.s32.totalorder %v404, 0
    %v406 = vsub.s32 0, %v404
    %v407 = vsel %vm405, %v406, %v404
    %v408 = vclz %v407
    %v409 = vsub.s32 %v408, 2
    %vm410 = vcmp.gt.s32.totalorder 0, %v409
    %v411 = vsel %vm410, 0, %v409
    %v412 = vsub.s32 32, %v411
    %v413 = vshll.u32 %v404, %v411
    %v414 = vshrl.u32 %v396, %v412
    %v415 = vor.u32 %v413, %v414
    %v416 = vsub.s32 4294967266, %v411
    %v417 = vadd.s32 %v416, 127
    %v418 = vshll.u32 %v417, 23
    %v419 = vor.u32 4788187, %v418
    %v420 = vand.u32 2147483647, %v419
    %v422 = vcvt.s32.f32 %v415
    %v423 = vmul.f32 %v422, %v420
    %v424 = vxor.u32 %v423, 2147483648
    %v425 = vsel %vm342, %v424, %v423
    %v426 = vsub.s32 4, %v402
    %v427 = vsel %vm342, %v426, %v402
    %v428 = vsel %vm341, %v233, %v425
    %v429 = vsel %vm341, 0, %v427
    %v430 = vcosq.f32.pop %v428
    %v431 = vsinq.f32.pop %v428
    %vm432 = vweird.f32 %v233
    %v433 = vand.u32 %v429, 3
    %vm434 = vcmp.lt.s32.totalorder %v433, 2
    %vm435 = vcmp.eq.s32.totalorder %v433, 0
    %v436 = vxor.u32 %v431, 2147483648
    %v437 = vsel %vm435, %v430, %v436
    %vm438 = vcmp.eq.s32.totalorder %v433, 2
    %v439 = vxor.u32 %v430, 2147483648
    %v440 = vsel %vm438, %v439, %v431
    %v441 = vsel %vm434, %v437, %v440
    %v442 = vsel %vm432, nan, %v441
    %s443 = scalar_lea.vmem [#allocation5], 24
    %444 = vst [vmem:[%s443] sm:$0xff] %v442
    %v445 = vld [vmem:[#allocation2] sm:$0xff]
    %v446 = vmul.f32 %v445, 4.0
    %v447 = vand.u32 2147483647, %v446
    %vm448 = vcmp.le.f32.partialorder %v447, 0.7853982
    %vm449 = vcmp.lt.s32.totalorder %v446, 0
    %v450 = vand.u32 %v446, 2139095040
    %v451 = vshrl.u32 %v450, 23
    %v452 = vsub.s32 %v451, 127
    %v453 = vand.u32 2147483647, %v446
    %v454 = vand.u32 %v453, 8388607
    %v455 = vor.u32 %v454, 8388608
    %v456 = vsub.s32 0, %v455
    %v457 = vadd.s32 %v452, 1
    %vm458 = vcmp.gt.s32.totalorder %v457, 0
    %v459 = vsel %vm458, %v457, 0
    %v460 = vshrl.u32 %v459, 5
    %v461 = vand.u32 %v459, 31
    %v462 = vsub.s32 32, %v461
    %v463 = vshrl.u32 683565275, %v462
    %v464 = vshll.u32 683565275, %v461
    %v465 = vshrl.u32 2475754826, %v462
    %v466 = vor.u32 %v464, %v465
    %v467 = vshll.u32 2475754826, %v461
    %v468 = vshrl.u32 2131351028, %v462
    %v469 = vor.u32 %v467, %v468
    %v470 = vshll.u32 2131351028, %v461
    %v471 = vshrl.u32 2102212464, %v462
    %v472 = vor.u32 %v470, %v471
    %v473 = vshll.u32 2102212464, %v461
    %v474 = vshrl.u32 920167782, %v462
    %v475 = vor.u32 %v473, %v474
    %v476 = vshll.u32 920167782, %v461
    %v477 = vshrl.u32 1326507024, %v462
    %v478 = vor.u32 %v476, %v477
    %vm479 = vcmp.lt.s32.totalorder %v460, 1
    %vm480 = vcmp.lt.s32.totalorder %v460, 2
    %vm481 = vcmp.lt.s32.totalorder %v460, 3
    %vm482 = vcmp.lt.s32.totalorder %v460, 4
    %v483 = vsel %vm479, %v463, %v466
    %v484 = vsel %vm482, %v472, 2102212464
    %v485 = vsel %vm481, %v469, %v484
    %v486 = vsel %vm480, %v483, %v485
    %v487 = vsel %vm479, %v466, %v469
    %v488 = vsel %vm482, %v475, 920167782
    %v489 = vsel %vm481, %v472, %v488
    %v490 = vsel %vm480, %v487, %v489
    %v491 = vsel %vm479, %v469, %v472
    %v492 = vsel %vm482, %v478, 1326507024
    %v493 = vsel %vm481, %v475, %v492
    %v494 = vsel %vm480, %v491, %v493
    %v495 = vshll.u32 %v455, 8
    %v496 = vmul.u32.u64.compose %v495, %v494
    %v497 = vextract.low.u32 %v496
    %v498 = vextract.high.u32 %v496
    %v499 = vmul.u32.u64.compose %v495, %v490
    %v500 = vextract.low.u32 %v499
    %v501 = vextract.high.u32 %v499
    %v502 = vmul.u32 %v495, %v486
    %v503 = vadd.s32 %v498, %v500
    %vm504 = vc.u32 %v498, %v500
    %v505 = vadd.s32 %v501, 1
    %v506 = vsel %vm504, %v505, %v501
    %v507 = vadd.s32 %v502, %v506
    %v508 = vadd.s32 %v507, 536870912
    %v509 = vshrl.u32 %v508, 30
    %v510 = vshll.u32 %v509, 30
    %v511 = vsub.s32 %v507, %v510
    %vm512 = vcmp.lt.s32.totalorder %v511, 0
    %v513 = vsub.s32 0, %v511
    %v514 = vsel %vm512, %v513, %v511
    %v515 = vclz %v514
    %v516 = vsub.s32 %v515, 2
    %vm517 = vcmp.gt.s32.totalorder 0, %v516
    %v518 = vsel %vm517, 0, %v516
    %v519 = vsub.s32 32, %v518
    %v520 = vshll.u32 %v511, %v518
    %v521 = vshrl.u32 %v503, %v519
    %v522 = vor.u32 %v520, %v521
    %v523 = vsub.s32 4294967266, %v518
    %v524 = vadd.s32 %v523, 127
    %v525 = vshll.u32 %v524, 23
    %v526 = vor.u32 4788187, %v525
    %v527 = vand.u32 2147483647, %v526
    %v529 = vcvt.s32.f32 %v522
    %v530 = vmul.f32 %v529, %v527
    %v531 = vxor.u32 %v530, 2147483648
    %v532 = vsel %vm449, %v531, %v530
    %v533 = vsub.s32 4, %v509
    %v534 = vsel %vm449, %v533, %v509
    %v535 = vsel %vm448, %v446, %v532
    %v536 = vsel %vm448, 0, %v534
    %v537 = vcosq.f32.pop %v535
    %v538 = vsinq.f32.pop %v535
    %vm539 = vweird.f32 %v446
    %v540 = vadd.s32 %v536, 3
    %v541 = vand.u32 %v540, 3
    %vm542 = vcmp.lt.s32.totalorder %v541, 2
    %vm543 = vcmp.eq.s32.totalorder %v541, 0
    %v544 = vxor.u32 %v538, 2147483648
    %v545 = vsel %vm543, %v537, %v544
    %vm546 = vcmp.eq.s32.totalorder %v541, 2
    %v547 = vxor.u32 %v537, 2147483648
    %v548 = vsel %vm546, %v547, %v538
    %v549 = vsel %vm542, %v545, %v548
    %v550 = vsel %vm539, nan, %v549
    %s551 = scalar_lea.vmem [#allocation5], 32
    %552 = vst [vmem:[%s551] sm:$0xff] %v550
    %v553 = vand.u32 2147483647, %v446
    %vm554 = vcmp.le.f32.partialorder %v553, 0.7853982
    %vm555 = vcmp.lt.s32.totalorder %v446, 0
    %v556 = vand.u32 %v446, 2139095040
    %v557 = vshrl.u32 %v556, 23
    %v558 = vsub.s32 %v557, 127
    %v559 = vand.u32 2147483647, %v446
    %v560 = vand.u32 %v559, 8388607
    %v561 = vor.u32 %v560, 8388608
    %v562 = vsub.s32 0, %v561
    %v563 = vadd.s32 %v558, 1
    %vm564 = vcmp.gt.s32.totalorder %v563, 0
    %v565 = vsel %vm564, %v563, 0
    %v566 = vshrl.u32 %v565, 5
    %v567 = vand.u32 %v565, 31
    %v568 = vsub.s32 32, %v567
    %v569 = vshrl.u32 683565275, %v568
    %v570 = vshll.u32 683565275, %v567
    %v571 = vshrl.u32 2475754826, %v568
    %v572 = vor.u32 %v570, %v571
    %v573 = vshll.u32 2475754826, %v567
    %v574 = vshrl.u32 2131351028, %v568
    %v575 = vor.u32 %v573, %v574
    %v576 = vshll.u32 2131351028, %v567
    %v577 = vshrl.u32 2102212464, %v568
    %v578 = vor.u32 %v576, %v577
    %v579 = vshll.u32 2102212464, %v567
    %v580 = vshrl.u32 920167782, %v568
    %v581 = vor.u32 %v579, %v580
    %v582 = vshll.u32 920167782, %v567
    %v583 = vshrl.u32 1326507024, %v568
    %v584 = vor.u32 %v582, %v583
    %vm585 = vcmp.lt.s32.totalorder %v566, 1
    %vm586 = vcmp.lt.s32.totalorder %v566, 2
    %vm587 = vcmp.lt.s32.totalorder %v566, 3
    %vm588 = vcmp.lt.s32.totalorder %v566, 4
    %v589 = vsel %vm585, %v569, %v572
    %v590 = vsel %vm588, %v578, 2102212464
    %v591 = vsel %vm587, %v575, %v590
    %v592 = vsel %vm586, %v589, %v591
    %v593 = vsel %vm585, %v572, %v575
    %v594 = vsel %vm588, %v581, 920167782
    %v595 = vsel %vm587, %v578, %v594
    %v596 = vsel %vm586, %v593, %v595
    %v597 = vsel %vm585, %v575, %v578
    %v598 = vsel %vm588, %v584, 1326507024
    %v599 = vsel %vm587, %v581, %v598
    %v600 = vsel %vm586, %v597, %v599
    %v601 = vshll.u32 %v561, 8
    %v602 = vmul.u32.u64.compose %v601, %v600
    %v603 = vextract.low.u32 %v602
    %v604 = vextract.high.u32 %v602
    %v605 = vmul.u32.u64.compose %v601, %v596
    %v606 = vextract.low.u32 %v605
    %v607 = vextract.high.u32 %v605
    %v608 = vmul.u32 %v601, %v592
    %v609 = vadd.s32 %v604, %v606
    %vm610 = vc.u32 %v604, %v606
    %v611 = vadd.s32 %v607, 1
    %v612 = vsel %vm610, %v611, %v607
    %v613 = vadd.s32 %v608, %v612
    %v614 = vadd.s32 %v613, 536870912
    %v615 = vshrl.u32 %v614, 30
    %v616 = vshll.u32 %v615, 30
    %v617 = vsub.s32 %v613, %v616
    %vm618 = vcmp.lt.s32.totalorder %v617, 0
    %v619 = vsub.s32 0, %v617
    %v620 = vsel %vm618, %v619, %v617
    %v621 = vclz %v620
    %v622 = vsub.s32 %v621, 2
    %vm623 = vcmp.gt.s32.totalorder 0, %v622
    %v624 = vsel %vm623, 0, %v622
    %v625 = vsub.s32 32, %v624
    %v626 = vshll.u32 %v617, %v624
    %v627 = vshrl.u32 %v609, %v625
    %v628 = vor.u32 %v626, %v627
    %v629 = vsub.s32 4294967266, %v624
    %v630 = vadd.s32 %v629, 127
    %v631 = vshll.u32 %v630, 23
    %v632 = vor.u32 4788187, %v631
    %v633 = vand.u32 2147483647, %v632
    %v635 = vcvt.s32.f32 %v628
    %v636 = vmul.f32 %v635, %v633
    %v637 = vxor.u32 %v636, 2147483648
    %v638 = vsel %vm555, %v637, %v636
    %v639 = vsub.s32 4, %v615
    %v640 = vsel %vm555, %v639, %v615
    %v641 = vsel %vm554, %v446, %v638
    %v642 = vsel %vm554, 0, %v640
    %v643 = vcosq.f32.pop %v641
    %v644 = vsinq.f32.pop %v641
    %vm645 = vweird.f32 %v446
    %v646 = vand.u32 %v642, 3
    %vm647 = vcmp.lt.s32.totalorder %v646, 2
    %vm648 = vcmp.eq.s32.totalorder %v646, 0
    %v649 = vxor.u32 %v644, 2147483648
    %v650 = vsel %vm648, %v643, %v649
    %vm651 = vcmp.eq.s32.totalorder %v646, 2
    %v652 = vxor.u32 %v643, 2147483648
    %v653 = vsel %vm651, %v652, %v644
    %v654 = vsel %vm647, %v650, %v653
    %v655 = vsel %vm645, nan, %v654
    %s656 = scalar_lea.vmem [#allocation5], 40
    %657 = vst [vmem:[%s656] sm:$0xff] %v655
    %v658 = vld [vmem:[#allocation2] sm:$0xff]
    %v659 = vmul.f32 %v658, 8.0
    %v660 = vand.u32 2147483647, %v659
    %vm661 = vcmp.le.f32.partialorder %v660, 0.7853982
    %vm662 = vcmp.lt.s32.totalorder %v659, 0
    %v663 = vand.u32 %v659, 2139095040
    %v664 = vshrl.u32 %v663, 23
    %v665 = vsub.s32 %v664, 127
    %v666 = vand.u32 2147483647, %v659
    %v667 = vand.u32 %v666, 8388607
    %v668 = vor.u32 %v667, 8388608
    %v669 = vsub.s32 0, %v668
    %v670 = vadd.s32 %v665, 1
    %vm671 = vcmp.gt.s32.totalorder %v670, 0
    %v672 = vsel %vm671, %v670, 0
    %v673 = vshrl.u32 %v672, 5
    %v674 = vand.u32 %v672, 31
    %v675 = vsub.s32 32, %v674
    %v676 = vshrl.u32 683565275, %v675
    %v677 = vshll.u32 683565275, %v674
    %v678 = vshrl.u32 2475754826, %v675
    %v679 = vor.u32 %v677, %v678
    %v680 = vshll.u32 2475754826, %v674
    %v681 = vshrl.u32 2131351028, %v675
    %v682 = vor.u32 %v680, %v681
    %v683 = vshll.u32 2131351028, %v674
    %v684 = vshrl.u32 2102212464, %v675
    %v685 = vor.u32 %v683, %v684
    %v686 = vshll.u32 2102212464, %v674
    %v687 = vshrl.u32 920167782, %v675
    %v688 = vor.u32 %v686, %v687
    %v689 = vshll.u32 920167782, %v674
    %v690 = vshrl.u32 1326507024, %v675
    %v691 = vor.u32 %v689, %v690
    %vm692 = vcmp.lt.s32.totalorder %v673, 1
    %vm693 = vcmp.lt.s32.totalorder %v673, 2
    %vm694 = vcmp.lt.s32.totalorder %v673, 3
    %vm695 = vcmp.lt.s32.totalorder %v673, 4
    %v696 = vsel %vm692, %v676, %v679
    %v697 = vsel %vm695, %v685, 2102212464
    %v698 = vsel %vm694, %v682, %v697
    %v699 = vsel %vm693, %v696, %v698
    %v700 = vsel %vm692, %v679, %v682
    %v701 = vsel %vm695, %v688, 920167782
    %v702 = vsel %vm694, %v685, %v701
    %v703 = vsel %vm693, %v700, %v702
    %v704 = vsel %vm692, %v682, %v685
    %v705 = vsel %vm695, %v691, 1326507024
    %v706 = vsel %vm694, %v688, %v705
    %v707 = vsel %vm693, %v704, %v706
    %v708 = vshll.u32 %v668, 8
    %v709 = vmul.u32.u64.compose %v708, %v707
    %v710 = vextract.low.u32 %v709
    %v711 = vextract.high.u32 %v709
    %v712 = vmul.u32.u64.compose %v708, %v703
    %v713 = vextract.low.u32 %v712
    %v714 = vextract.high.u32 %v712
    %v715 = vmul.u32 %v708, %v699
    %v716 = vadd.s32 %v711, %v713
    %vm717 = vc.u32 %v711, %v713
    %v718 = vadd.s32 %v714, 1
    %v719 = vsel %vm717, %v718, %v714
    %v720 = vadd.s32 %v715, %v719
    %v721 = vadd.s32 %v720, 536870912
    %v722 = vshrl.u32 %v721, 30
    %v723 = vshll.u32 %v722, 30
    %v724 = vsub.s32 %v720, %v723
    %vm725 = vcmp.lt.s32.totalorder %v724, 0
    %v726 = vsub.s32 0, %v724
    %v727 = vsel %vm725, %v726, %v724
    %v728 = vclz %v727
    %v729 = vsub.s32 %v728, 2
    %vm730 = vcmp.gt.s32.totalorder 0, %v729
    %v731 = vsel %vm730, 0, %v729
    %v732 = vsub.s32 32, %v731
    %v733 = vshll.u32 %v724, %v731
    %v734 = vshrl.u32 %v716, %v732
    %v735 = vor.u32 %v733, %v734
    %v736 = vsub.s32 4294967266, %v731
    %v737 = vadd.s32 %v736, 127
    %v738 = vshll.u32 %v737, 23
    %v739 = vor.u32 4788187, %v738
    %v740 = vand.u32 2147483647, %v739
    %v742 = vcvt.s32.f32 %v735
    %v743 = vmul.f32 %v742, %v740
    %v744 = vxor.u32 %v743, 2147483648
    %v745 = vsel %vm662, %v744, %v743
    %v746 = vsub.s32 4, %v722
    %v747 = vsel %vm662, %v746, %v722
    %v748 = vsel %vm661, %v659, %v745
    %v749 = vsel %vm661, 0, %v747
    %v750 = vcosq.f32.pop %v748
    %v751 = vsinq.f32.pop %v748
    %vm752 = vweird.f32 %v659
    %v753 = vadd.s32 %v749, 3
    %v754 = vand.u32 %v753, 3
    %vm755 = vcmp.lt.s32.totalorder %v754, 2
    %vm756 = vcmp.eq.s32.totalorder %v754, 0
    %v757 = vxor.u32 %v751, 2147483648
    %v758 = vsel %vm756, %v750, %v757
    %vm759 = vcmp.eq.s32.totalorder %v754, 2
    %v760 = vxor.u32 %v750, 2147483648
    %v761 = vsel %vm759, %v760, %v751
    %v762 = vsel %vm755, %v758, %v761
    %v763 = vsel %vm752, nan, %v762
    %s764 = scalar_lea.vmem [#allocation5], 48
    %765 = vst [vmem:[%s764] sm:$0xff] %v763
    %v766 = vand.u32 2147483647, %v659
    %vm767 = vcmp.le.f32.partialorder %v766, 0.7853982
    %vm768 = vcmp.lt.s32.totalorder %v659, 0
    %v769 = vand.u32 %v659, 2139095040
    %v770 = vshrl.u32 %v769, 23
    %v771 = vsub.s32 %v770, 127
    %v772 = vand.u32 2147483647, %v659
    %v773 = vand.u32 %v772, 8388607
    %v774 = vor.u32 %v773, 8388608
    %v775 = vsub.s32 0, %v774
    %v776 = vadd.s32 %v771, 1
    %vm777 = vcmp.gt.s32.totalorder %v776, 0
    %v778 = vsel %vm777, %v776, 0
    %v779 = vshrl.u32 %v778, 5
    %v780 = vand.u32 %v778, 31
    %v781 = vsub.s32 32, %v780
    %v782 = vshrl.u32 683565275, %v781
    %v783 = vshll.u32 683565275, %v780
    %v784 = vshrl.u32 2475754826, %v781
    %v785 = vor.u32 %v783, %v784
    %v786 = vshll.u32 2475754826, %v780
    %v787 = vshrl.u32 2131351028, %v781
    %v788 = vor.u32 %v786, %v787
    %v789 = vshll.u32 2131351028, %v780
    %v790 = vshrl.u32 2102212464, %v781
    %v791 = vor.u32 %v789, %v790
    %v792 = vshll.u32 2102212464, %v780
    %v793 = vshrl.u32 920167782, %v781
    %v794 = vor.u32 %v792, %v793
    %v795 = vshll.u32 920167782, %v780
    %v796 = vshrl.u32 1326507024, %v781
    %v797 = vor.u32 %v795, %v796
    %vm798 = vcmp.lt.s32.totalorder %v779, 1
    %vm799 = vcmp.lt.s32.totalorder %v779, 2
    %vm800 = vcmp.lt.s32.totalorder %v779, 3
    %vm801 = vcmp.lt.s32.totalorder %v779, 4
    %v802 = vsel %vm798, %v782, %v785
    %v803 = vsel %vm801, %v791, 2102212464
    %v804 = vsel %vm800, %v788, %v803
    %v805 = vsel %vm799, %v802, %v804
    %v806 = vsel %vm798, %v785, %v788
    %v807 = vsel %vm801, %v794, 920167782
    %v808 = vsel %vm800, %v791, %v807
    %v809 = vsel %vm799, %v806, %v808
    %v810 = vsel %vm798, %v788, %v791
    %v811 = vsel %vm801, %v797, 1326507024
    %v812 = vsel %vm800, %v794, %v811
    %v813 = vsel %vm799, %v810, %v812
    %v814 = vshll.u32 %v774, 8
    %v815 = vmul.u32.u64.compose %v814, %v813
    %v816 = vextract.low.u32 %v815
    %v817 = vextract.high.u32 %v815
    %v818 = vmul.u32.u64.compose %v814, %v809
    %v819 = vextract.low.u32 %v818
    %v820 = vextract.high.u32 %v818
    %v821 = vmul.u32 %v814, %v805
    %v822 = vadd.s32 %v817, %v819
    %vm823 = vc.u32 %v817, %v819
    %v824 = vadd.s32 %v820, 1
    %v825 = vsel %vm823, %v824, %v820
    %v826 = vadd.s32 %v821, %v825
    %v827 = vadd.s32 %v826, 536870912
    %v828 = vshrl.u32 %v827, 30
    %v829 = vshll.u32 %v828, 30
    %v830 = vsub.s32 %v826, %v829
    %vm831 = vcmp.lt.s32.totalorder %v830, 0
    %v832 = vsub.s32 0, %v830
    %v833 = vsel %vm831, %v832, %v830
    %v834 = vclz %v833
    %v835 = vsub.s32 %v834, 2
    %vm836 = vcmp.gt.s32.totalorder 0, %v835
    %v837 = vsel %vm836, 0, %v835
    %v838 = vsub.s32 32, %v837
    %v839 = vshll.u32 %v830, %v837
    %v840 = vshrl.u32 %v822, %v838
    %v841 = vor.u32 %v839, %v840
    %v842 = vsub.s32 4294967266, %v837
    %v843 = vadd.s32 %v842, 127
    %v844 = vshll.u32 %v843, 23
    %v845 = vor.u32 4788187, %v844
    %v846 = vand.u32 2147483647, %v845
    %v848 = vcvt.s32.f32 %v841
    %v849 = vmul.f32 %v848, %v846
    %v850 = vxor.u32 %v849, 2147483648
    %v851 = vsel %vm768, %v850, %v849
    %v852 = vsub.s32 4, %v828
    %v853 = vsel %vm768, %v852, %v828
    %v854 = vsel %vm767, %v659, %v851
    %v855 = vsel %vm767, 0, %v853
    %v856 = vcosq.f32.pop %v854
    %v857 = vsinq.f32.pop %v854
    %vm858 = vweird.f32 %v659
    %v859 = vand.u32 %v855, 3
    %vm860 = vcmp.lt.s32.totalorder %v859, 2
    %vm861 = vcmp.eq.s32.totalorder %v859, 0
    %v862 = vxor.u32 %v857, 2147483648
    %v863 = vsel %vm861, %v856, %v862
    %vm864 = vcmp.eq.s32.totalorder %v859, 2
    %v865 = vxor.u32 %v856, 2147483648
    %v866 = vsel %vm864, %v865, %v857
    %v867 = vsel %vm860, %v863, %v866
    %v868 = vsel %vm858, nan, %v867
    %s869 = scalar_lea.vmem [#allocation5], 56
    %870 = vst [vmem:[%s869] sm:$0xff] %v868
    // Predicated region
    $region10: #{tpu_custom_call.1} parent=1 // pred_check
      _
    $region11: #{tpu_custom_call.1} parent=1 // pred_check_branch
      %872 = sbr.rel (0) target = $region13
    $region12: #{tpu_custom_call.1} parent=1 // pred_region
      %s874 = ssub.s32 1024, 1024
      %875 = vsyncadd [#allocation4], %s874
      %s876 = sshll.u32 [#allocation5], 4
      %s877 = int_to_ptr.vmem [resolvable:$true] %s876
      %882 = dma.vmem_to_hbm [thread:$0]  %s877, 1024, %s1, [#allocation4], 128, 128, 8
    $region13: #{tpu_custom_call.1} parent=1 // pred_fallthru
      _
    // Predicated region
    $region14: #{tpu_custom_call.1} parent=1 // pred_check
      _
    $region15: #{tpu_custom_call.1} parent=1 // pred_check_branch
      %884 = sbr.rel (0) target = $region17
    $region16: #{tpu_custom_call.1} parent=1 // pred_region
      %885 = dma.done [#allocation4], 1024
    $region17: #{tpu_custom_call.1} parent=1 // pred_fallthru
      _
    %886 = vsyncpa [#allocation3], 1
    %887 = vsyncpa [#allocation4], 1

</llo_original>
